<compile_context>
chip_gen: v5e
topology: v5e:2x2
jax: 0.10.0
libtpu: 0.0.40
codegen_flags: <defaults>
</compile_context>

<pallas_src>
import numpy as np
import jax
import jax.numpy as jnp
from jax.experimental import pallas as pl
from jax.experimental.pallas import tpu as pltpu


# ----------------------------------------------------------------------------
# Pallas kernel (the whole hot path: IDFT + window + OLA + normalization)
# ----------------------------------------------------------------------------
def _make_istft_kernel(n_chunks, hb, s_pad, hop, precision):
    rows_blk = hb * s_pad                 # matmul M per step
    tail_rows = (n_chunks - 1) * s_pad    # extra frames overlapping the next block

    def compute(x0, x1, basis_ref, env_ref, out_ref, buf_ref):
        # Stage the HB + n_chunks - 1 overlapping frames contiguously in VMEM
        # (all slices are sublane aligned: s_pad % 8 == 0).
        buf_ref[0:rows_blk, :] = x0[...]
        if tail_rows:
            buf_ref[rows_blk:rows_blk + tail_rows, :] = x1[...]
        # out[h] = sum_r X_pad[h + r] @ B_{nc-1-r}   (static unroll, nc is small)
        for r in range(n_chunks):
            slab = buf_ref[r * s_pad:r * s_pad + rows_blk, :]
            part = jnp.dot(slab, basis_ref[n_chunks - 1 - r],
                           preferred_element_type=jnp.float32,
                           precision=precision)
            part = part.reshape(hb, s_pad, hop)
            if r == 0:
                out_ref[...] = part
            else:
                out_ref[...] += part
        # fused OLA window-envelope normalization (broadcast over streams)
        out_ref[...] = out_ref[...] * env_ref[...]

    if n_chunks > 1:
        def kernel(x0_ref, x1_ref, basis_ref, env_ref, out_ref, buf_ref):
            compute(x0_ref, x1_ref, basis_ref, env_ref, out_ref, buf_ref)
    else:
        def kernel(x0_ref, basis_ref, env_ref, out_ref, buf_ref):
            compute(x0_ref, None, basis_ref, env_ref, out_ref, buf_ref)
    return kernel


# ----------------------------------------------------------------------------
# Static (trace-time) helpers
# ----------------------------------------------------------------------------
def _round_up(x, m):
    return ((x + m - 1) // m) * m


def _hann_window(win_length):
    # torch.hann_window default (periodic=True)
    n = np.arange(win_length, dtype=np.float64)
    return 0.5 - 0.5 * np.cos(2.0 * np.pi * n / win_length)


def _irfft_bases(n_fft):
    """Real/imag bases so that irfft(X, n_fft) == Xr @ Br + Xi @ Bi."""
    F = n_fft // 2 + 1
    k = np.arange(F, dtype=np.float64)[:, None]
    n = np.arange(n_fft, dtype=np.float64)[None, :]
    ang = 2.0 * np.pi * k * n / n_fft
    c = np.full((F, 1), 2.0)
    c[0, 0] = 1.0
    if n_fft % 2 == 0:
        c[-1, 0] = 1.0
    br = c * np.cos(ang) / n_fft
    bi = -c * np.sin(ang) / n_fft
    return br, bi


# ----------------------------------------------------------------------------
# STFTDecoder port
# ----------------------------------------------------------------------------
class STFTDecoderPallas:
    """JAX/Pallas port of STFTDecoder.forward (i.e. torch.istft)."""

    def __init__(self, n_fft=512, win_length=None, hop_length=128, window="hann",
                 center=True, normalized=False, onesided=True,
                 compute_dtype=jnp.float32, precision=None):
        if not onesided:
            # TODO(synk): onesided=False (full-spectrum ifft) reconstruction path
            raise NotImplementedError("only onesided=True is supported")
        self.n_fft = n_fft
        self.win_length = win_length if win_length else n_fft
        self.hop_length = hop_length
        self.center = center
        self.normalized = normalized
        self._compute_dtype = compute_dtype     # bf16 optional (v6e/v7x bandwidth win)
        self._precision = precision             # e.g. jax.lax.Precision.HIGHEST

        if window is None:
            win = np.ones(self.win_length, dtype=np.float64)
        elif window == "hann":
            win = _hann_window(self.win_length)
        else:
            raise ValueError(f"{window} window is not implemented")
        # torch.istft: window is centered/zero-padded to n_fft
        pad_l = (n_fft - self.win_length) // 2
        pad_r = n_fft - self.win_length - pad_l
        self._win = np.pad(win, (pad_l, pad_r)).astype(np.float32)

        # Frames are zero-padded (inside the basis) to a multiple of hop so the
        # fused kernel works on hop-sized chunks.
        self._n_chunks = -(-n_fft // hop_length)          # ceil(n_fft / hop)
        self._frame_len = self._n_chunks * hop_length

        F = n_fft // 2 + 1
        # Drop the all-zero imag-DC (and imag-Nyquist for even n_fft) basis rows
        # -> contraction dim K = n_fft exactly (clean MXU tiles).
        self._imag_hi = F - 1 if n_fft % 2 == 0 else F
        self._K = F + self._imag_hi - 1
        assert self._K == n_fft

        br, bi = _irfft_bases(n_fft)
        rows = np.concatenate([br, bi[1:self._imag_hi]], axis=0)   # (K, n_fft)
        scale = float(n_fft) ** 0.5 if normalized else 1.0
        rows = rows * self._win.astype(np.float64)[None, :] * scale  # window folded in
        padded = np.zeros((self._K, self._frame_len), dtype=np.float64)
        padded[:, :n_fft] = rows
        basis3 = padded.reshape(self._K, self._n_chunks, hop_length).transpose(1, 0, 2)
        self._basis = jnp.asarray(basis3.astype(np.float32)).astype(compute_dtype)

        self._env_cache = {}   # (n_frames, num_hops_pad) -> (inv_env device, env numpy)

    # ---- kernel launcher -----------------------------------------------------
    def _istft_call(self, x, inv_env3, hb, s_pad, n_blocks):
        nc, hop, K = self._n_chunks, self.hop_length, self._K
        rows_blk = hb * s_pad
        tail_rows = (nc - 1) * s_pad
        kernel = _make_istft_kernel(nc, hb, s_pad, hop, self._precision)

        in_specs = [pl.BlockSpec((rows_blk, K), lambda i: (i, 0))]
        operands = [x]
        if nc > 1:
            step = hb // (nc - 1)     # hb is a multiple of nc-1 by construction
            in_specs.append(
                pl.BlockSpec((tail_rows, K), lambda i, s=step: ((i + 1) * s, 0)))
            operands.append(x)
        in_specs += [
            pl.BlockSpec((nc, K, hop), lambda i: (0, 0, 0)),   # resident basis
            pl.BlockSpec((hb, 1, hop), lambda i: (i, 0, 0)),   # 1/env for this block
        ]
        operands += [self._basis, inv_env3]

        return pl.pallas_call(
            kernel,
            out_shape=jax.ShapeDtypeStruct((n_blocks * hb, s_pad, hop), jnp.float32),
            grid=(n_blocks,),
            in_specs=in_specs,
            out_specs=pl.BlockSpec((hb, s_pad, hop), lambda i: (i, 0, 0)),
            scratch_shapes=[pltpu.VMEM(((hb + nc - 1) * s_pad, K), x.dtype)],
            compiler_params=pltpu.CompilerParams(
                dimension_semantics=("parallel",)),
        )(*operands)

    # ---- static helpers ------------------------------------------------------
    def _inv_env(self, n_frames, num_hops_pad):
        key = (n_frames, num_hops_pad)
        cached = self._env_cache.get(key)
        if cached is not None:
            return cached
        hop, n_fft = self.hop_length, self.n_fft
        env = np.zeros(num_hops_pad * hop, dtype=np.float64)
        wsq = self._win.astype(np.float64) ** 2
        for t in range(n_frames):
            env[t * hop: t * hop + n_fft] += wsq
        inv = np.where(env > 1e-11, 1.0 / np.maximum(env, 1e-30), 0.0)
        inv3 = jnp.asarray(inv.reshape(num_hops_pad, 1, hop).astype(np.float32))
        self._env_cache[key] = (inv3, env)
        return inv3, env

    # ---- forward -------------------------------------------------------------
    def forward(self, spec, ilens):
        """spec: complex (B, T, F) or (B, T, C, F); ilens: host int lengths (B,)."""
        if not jnp.iscomplexobj(spec):
            raise TypeError("Only support complex tensors for stft decoder")
        n_fft, hop, nc = self.n_fft, self.hop_length, self._n_chunks
        bs = spec.shape[0]
        multi_channel = spec.ndim == 4
        if multi_channel:
            C = spec.shape[2]
            spec = jnp.transpose(spec, (0, 2, 1, 3)).reshape(
                bs * C, spec.shape[1], spec.shape[3])
        n_streams, n_frames, F = spec.shape
        assert F == n_fft // 2 + 1, "freq dim must be n_fft//2 + 1 (onesided)"

        # --- tiling geometry (all static) ---
        s_pad = _round_up(max(n_streams, 1), 8)          # sublane-dense stream axis
        num_hops = n_frames + nc - 1                     # valid hop-slots in the signal
        hb = max(nc, min(max(512 // s_pad, 1), _round_up(num_hops, 8)))  # ~512 M rows
        if nc > 1:
            hb = max(nc - 1, (hb // (nc - 1)) * (nc - 1))  # tail spec must be block aligned
        n_blocks = -(-num_hops // hb)
        num_hops_pad = n_blocks * hb
        n_frames_pad = (n_blocks + 1) * hb               # +1 block so the tail spec exists

        # --- build X = [Re(0..F-1) | Im(1..hi-1)] (K = n_fft), frame-major rows ---
        # (XLA fuses transpose/real/imag/concat/pad into a single copy pass.)
        xr = jnp.real(spec)
        xi = jnp.imag(spec)
        x = jnp.concatenate([xr, xi[..., 1:self._imag_hi]], axis=-1)
        x = jnp.transpose(x, (1, 0, 2)).astype(jnp.float32)          # (T, S, K)
        front = nc - 1                                               # frames t<0 -> zeros
        back = n_frames_pad - front - n_frames
        x = jnp.pad(x, ((front, back), (0, s_pad - n_streams), (0, 0)))
        x = x.reshape(n_frames_pad * s_pad, self._K).astype(self._compute_dtype)

        inv_env3, env_np = self._inv_env(n_frames, num_hops_pad)
        out3 = self._istft_call(x, inv_env3, hb, s_pad, n_blocks)    # (Hpad, Spad, hop)

        sig = jnp.transpose(out3, (1, 0, 2)).reshape(s_pad, num_hops_pad * hop)

        ilens_np = np.asarray(ilens)
        length = int(ilens_np.max())          # output length must be static in JAX
        start = n_fft // 2 if self.center else 0
        end = start + length
        assert end <= num_hops * hop, "requested length exceeds reconstructable signal"
        assert env_np[start:end].min() > 1e-11, "window envelope ~0 inside requested output"

        wav = sig[:n_streams, start:end]
        if multi_channel:
            wav = jnp.transpose(wav.reshape(bs, -1, length), (0, 2, 1))
        return wav, jnp.asarray(ilens_np)


# ----------------------------------------------------------------------------
if __name__ == "__main__":
    B, T, n_fft, hop = 2, 8, 32, 8
    F = n_fft // 2 + 1
    key = jax.random.PRNGKey(0)
    kr, ki = jax.random.split(key)
    spec = (jax.random.normal(kr, (B, T, F), dtype=jnp.float32)
            + 1j * jax.random.normal(ki, (B, T, F), dtype=jnp.float32))
    ilens = np.array([40, 56], dtype=np.int64)

    dec = STFTDecoderPallas(n_fft=n_fft, win_length=None, hop_length=hop,
                            window="hann", center=True, normalized=False,
                            onesided=True)
    wav, wav_lens = dec.forward(spec, ilens)
    wav = jax.block_until_ready(wav)

    # ---- pure-NumPy reference (torch.istft math, no Pallas) -----------------
    spec_np = np.asarray(spec)
    win = dec._win.astype(np.float64)                         # (n_fft,)
    frames_ref = np.fft.irfft(spec_np, n=n_fft, axis=-1) * win[None, None, :]
    full_len = n_fft + hop * (T - 1)
    ola_ref = np.zeros((B, full_len), dtype=np.float64)
    env_ref = np.zeros(full_len, dtype=np.float64)
    for t in range(T):
        ola_ref[:, t * hop: t * hop + n_fft] += frames_ref[:, t]
        env_ref[t * hop: t * hop + n_fft] += win ** 2
    start = n_fft // 2
    length = int(ilens.max())
    ref = ola_ref[:, start:start + length] / env_ref[start:start + length]

    assert wav.shape == (B, length)
    np.testing.assert_allclose(np.asarray(wav), ref, rtol=1e-4, atol=1e-4)
    print("KERNEL_OK")
</pallas_src>

<mosaic_0001>
module attributes {stable_mosaic.version = 11 : i64} {
  func.func @kernel(%arg0: i32, %arg1: memref<120x32xf32, #tpu.memory_space<vmem>>, %arg2: memref<24x32xf32, #tpu.memory_space<vmem>>, %arg3: memref<4x32x8xf32, #tpu.memory_space<vmem>>, %arg4: memref<15x1x8xf32, #tpu.memory_space<vmem>>, %arg5: memref<15x8x8xf32, #tpu.memory_space<vmem>>, %arg6: memref<144x32xf32, #tpu.memory_space<vmem>>) attributes {dimension_semantics = [#tpu.dimension_semantics<parallel>], iteration_bounds = array<i64: 1>, scalar_prefetch = 0 : i64, scratch_operands = 1 : i64, tpu.core_type = #tpu.core_type<tc>, window_params = [{transform_indices = @transform_0, window_bounds = array<i64: 120, 32>}, {transform_indices = @transform_1, window_bounds = array<i64: 24, 32>}, {pipeline_mode = #tpu.pipeline_mode<synchronous>, transform_indices = @transform_2, window_bounds = array<i64: 4, 32, 8>}, {transform_indices = @transform_3, window_bounds = array<i64: 15, 1, 8>}, {transform_indices = @transform_4, window_bounds = array<i64: 15, 8, 8>}]} {
    %c0 = arith.constant 0 : index
    %c0_0 = arith.constant 0 : index
    %0 = vector.load %arg1[%c0, %c0_0] : memref<120x32xf32, #tpu.memory_space<vmem>>, vector<120x32xf32>
    %c0_1 = arith.constant 0 : index
    %c0_2 = arith.constant 0 : index
    %1 = vector.load %arg6[%c0_1, %c0_2] : memref<144x32xf32, #tpu.memory_space<vmem>>, vector<120x32xf32>
    tpu.vector_store %arg6[%c0_1, %c0_2], %0 {strides = array<i32>} : memref<144x32xf32, #tpu.memory_space<vmem>>, vector<120x32xf32>,
    %c0_3 = arith.constant 0 : index
    %c0_4 = arith.constant 0 : index
    %2 = vector.load %arg2[%c0_3, %c0_4] : memref<24x32xf32, #tpu.memory_space<vmem>>, vector<24x32xf32>
    %c120 = arith.constant 120 : index
    %c0_5 = arith.constant 0 : index
    %3 = vector.load %arg6[%c120, %c0_5] : memref<144x32xf32, #tpu.memory_space<vmem>>, vector<24x32xf32>
    tpu.vector_store %arg6[%c120, %c0_5], %2 {strides = array<i32>} : memref<144x32xf32, #tpu.memory_space<vmem>>, vector<24x32xf32>,
    %c0_6 = arith.constant 0 : index
    %c0_7 = arith.constant 0 : index
    %4 = vector.load %arg6[%c0_6, %c0_7] : memref<144x32xf32, #tpu.memory_space<vmem>>, vector<120x32xf32>
    %c3 = arith.constant 3 : index
    %c0_8 = arith.constant 0 : index
    %c0_9 = arith.constant 0 : index
    %5 = vector.load %arg3[%c3, %c0_8, %c0_9] : memref<4x32x8xf32, #tpu.memory_space<vmem>>, vector<1x32x8xf32>
    %6 = vector.shape_cast %5 : vector<1x32x8xf32> to vector<32x8xf32>
    %cst = arith.constant dense<0.000000e+00> : vector<120x8xf32>
    %7 = tpu.matmul %4, %6, %cst {dimension_numbers = #tpu.dot_dimension_numbers<[1], [0], [0], [1], [0, 0, 1, 1], [], []>} : vector<120x32xf32>, vector<32x8xf32>, vector<120x8xf32> -> vector<120x8xf32>
    %8 = vector.shape_cast %7 : vector<120x8xf32> to vector<15x8x8xf32>
    %c0_10 = arith.constant 0 : index
    %c0_11 = arith.constant 0 : index
    %c0_12 = arith.constant 0 : index
    %9 = vector.load %arg5[%c0_10, %c0_11, %c0_12] : memref<15x8x8xf32, #tpu.memory_space<vmem>>, vector<15x8x8xf32>
    tpu.vector_store %arg5[%c0_10, %c0_11, %c0_12], %8 {strides = array<i32>} : memref<15x8x8xf32, #tpu.memory_space<vmem>>, vector<15x8x8xf32>,
    %c8 = arith.constant 8 : index
    %c0_13 = arith.constant 0 : index
    %10 = vector.load %arg6[%c8, %c0_13] : memref<144x32xf32, #tpu.memory_space<vmem>>, vector<120x32xf32>
    %c2 = arith.constant 2 : index
    %c0_14 = arith.constant 0 : index
    %c0_15 = arith.constant 0 : index
    %11 = vector.load %arg3[%c2, %c0_14, %c0_15] : memref<4x32x8xf32, #tpu.memory_space<vmem>>, vector<1x32x8xf32>
    %12 = vector.shape_cast %11 : vector<1x32x8xf32> to vector<32x8xf32>
    %cst_16 = arith.constant dense<0.000000e+00> : vector<120x8xf32>
    %13 = tpu.matmul %10, %12, %cst_16 {dimension_numbers = #tpu.dot_dimension_numbers<[1], [0], [0], [1], [0, 0, 1, 1], [], []>} : vector<120x32xf32>, vector<32x8xf32>, vector<120x8xf32> -> vector<120x8xf32>
    %14 = vector.shape_cast %13 : vector<120x8xf32> to vector<15x8x8xf32>
    %c0_17 = arith.constant 0 : index
    %c0_18 = arith.constant 0 : index
    %c0_19 = arith.constant 0 : index
    %15 = vector.load %arg5[%c0_17, %c0_18, %c0_19] : memref<15x8x8xf32, #tpu.memory_space<vmem>>, vector<15x8x8xf32>
    %16 = arith.addf %15, %14 : vector<15x8x8xf32>
    %c0_20 = arith.constant 0 : index
    %c0_21 = arith.constant 0 : index
    %c0_22 = arith.constant 0 : index
    %17 = vector.load %arg5[%c0_20, %c0_21, %c0_22] : memref<15x8x8xf32, #tpu.memory_space<vmem>>, vector<15x8x8xf32>
    tpu.vector_store %arg5[%c0_20, %c0_21, %c0_22], %16 {strides = array<i32>} : memref<15x8x8xf32, #tpu.memory_space<vmem>>, vector<15x8x8xf32>,
    %c16 = arith.constant 16 : index
    %c0_23 = arith.constant 0 : index
    %18 = vector.load %arg6[%c16, %c0_23] : memref<144x32xf32, #tpu.memory_space<vmem>>, vector<120x32xf32>
    %c1 = arith.constant 1 : index
    %c0_24 = arith.constant 0 : index
    %c0_25 = arith.constant 0 : index
    %19 = vector.load %arg3[%c1, %c0_24, %c0_25] : memref<4x32x8xf32, #tpu.memory_space<vmem>>, vector<1x32x8xf32>
    %20 = vector.shape_cast %19 : vector<1x32x8xf32> to vector<32x8xf32>
    %cst_26 = arith.constant dense<0.000000e+00> : vector<120x8xf32>
    %21 = tpu.matmul %18, %20, %cst_26 {dimension_numbers = #tpu.dot_dimension_numbers<[1], [0], [0], [1], [0, 0, 1, 1], [], []>} : vector<120x32xf32>, vector<32x8xf32>, vector<120x8xf32> -> vector<120x8xf32>
    %22 = vector.shape_cast %21 : vector<120x8xf32> to vector<15x8x8xf32>
    %c0_27 = arith.constant 0 : index
    %c0_28 = arith.constant 0 : index
    %c0_29 = arith.constant 0 : index
    %23 = vector.load %arg5[%c0_27, %c0_28, %c0_29] : memref<15x8x8xf32, #tpu.memory_space<vmem>>, vector<15x8x8xf32>
    %24 = arith.addf %23, %22 : vector<15x8x8xf32>
    %c0_30 = arith.constant 0 : index
    %c0_31 = arith.constant 0 : index
    %c0_32 = arith.constant 0 : index
    %25 = vector.load %arg5[%c0_30, %c0_31, %c0_32] : memref<15x8x8xf32, #tpu.memory_space<vmem>>, vector<15x8x8xf32>
    tpu.vector_store %arg5[%c0_30, %c0_31, %c0_32], %24 {strides = array<i32>} : memref<15x8x8xf32, #tpu.memory_space<vmem>>, vector<15x8x8xf32>,
    %c24 = arith.constant 24 : index
    %c0_33 = arith.constant 0 : index
    %26 = vector.load %arg6[%c24, %c0_33] : memref<144x32xf32, #tpu.memory_space<vmem>>, vector<120x32xf32>
    %c0_34 = arith.constant 0 : index
    %c0_35 = arith.constant 0 : index
    %c0_36 = arith.constant 0 : index
    %27 = vector.load %arg3[%c0_34, %c0_35, %c0_36] : memref<4x32x8xf32, #tpu.memory_space<vmem>>, vector<1x32x8xf32>
    %28 = vector.shape_cast %27 : vector<1x32x8xf32> to vector<32x8xf32>
    %cst_37 = arith.constant dense<0.000000e+00> : vector<120x8xf32>
    %29 = tpu.matmul %26, %28, %cst_37 {dimension_numbers = #tpu.dot_dimension_numbers<[1], [0], [0], [1], [0, 0, 1, 1], [], []>} : vector<120x32xf32>, vector<32x8xf32>, vector<120x8xf32> -> vector<120x8xf32>
    %30 = vector.shape_cast %29 : vector<120x8xf32> to vector<15x8x8xf32>
    %c0_38 = arith.constant 0 : index
    %c0_39 = arith.constant 0 : index
    %c0_40 = arith.constant 0 : index
    %31 = vector.load %arg5[%c0_38, %c0_39, %c0_40] : memref<15x8x8xf32, #tpu.memory_space<vmem>>, vector<15x8x8xf32>
    %32 = arith.addf %31, %30 : vector<15x8x8xf32>
    %c0_41 = arith.constant 0 : index
    %c0_42 = arith.constant 0 : index
    %c0_43 = arith.constant 0 : index
    %33 = vector.load %arg5[%c0_41, %c0_42, %c0_43] : memref<15x8x8xf32, #tpu.memory_space<vmem>>, vector<15x8x8xf32>
    tpu.vector_store %arg5[%c0_41, %c0_42, %c0_43], %32 {strides = array<i32>} : memref<15x8x8xf32, #tpu.memory_space<vmem>>, vector<15x8x8xf32>,
    %c0_44 = arith.constant 0 : index
    %c0_45 = arith.constant 0 : index
    %c0_46 = arith.constant 0 : index
    %34 = vector.load %arg5[%c0_44, %c0_45, %c0_46] : memref<15x8x8xf32, #tpu.memory_space<vmem>>, vector<15x8x8xf32>
    %c0_47 = arith.constant 0 : index
    %c0_48 = arith.constant 0 : index
    %c0_49 = arith.constant 0 : index
    %35 = vector.load %arg4[%c0_47, %c0_48, %c0_49] : memref<15x1x8xf32, #tpu.memory_space<vmem>>, vector<15x1x8xf32>
    %36 = vector.broadcast %35 : vector<15x1x8xf32> to vector<15x8x8xf32>
    %37 = arith.mulf %34, %36 : vector<15x8x8xf32>
    %c0_50 = arith.constant 0 : index
    %c0_51 = arith.constant 0 : index
    %c0_52 = arith.constant 0 : index
    %38 = vector.load %arg5[%c0_50, %c0_51, %c0_52] : memref<15x8x8xf32, #tpu.memory_space<vmem>>, vector<15x8x8xf32>
    tpu.vector_store %arg5[%c0_50, %c0_51, %c0_52], %37 {strides = array<i32>} : memref<15x8x8xf32, #tpu.memory_space<vmem>>, vector<15x8x8xf32>,
    return
  }
  func.func @transform_0(%arg0: i32) -> (i32, i32) {
    %c0_i32 = arith.constant 0 : i32
    %c0_i32_0 = arith.constant 0 : i32
    return %arg0, %c0_i32 : i32, i32
  }
  func.func @transform_1(%arg0: i32) -> (i32, i32) {
    %c1_i32 = arith.constant 1 : i32
    %0 = arith.addi %arg0, %c1_i32 : i32
    %c5_i32 = arith.constant 5 : i32
    %1 = arith.muli %0, %c5_i32 : i32
    %c0_i32 = arith.constant 0 : i32
    %c0_i32_0 = arith.constant 0 : i32
    return %1, %c0_i32 : i32, i32
  }
  func.func @transform_2(%arg0: i32) -> (i32, i32, i32) {
    %c0_i32 = arith.constant 0 : i32
    %c0_i32_0 = arith.constant 0 : i32
    %c0_i32_1 = arith.constant 0 : i32
    %c0_i32_2 = arith.constant 0 : i32
    return %c0_i32, %c0_i32_0, %c0_i32_1 : i32, i32, i32
  }
  func.func @transform_3(%arg0: i32) -> (i32, i32, i32) {
    %c0_i32 = arith.constant 0 : i32
    %c0_i32_0 = arith.constant 0 : i32
    %c0_i32_1 = arith.constant 0 : i32
    return %arg0, %c0_i32, %c0_i32_0 : i32, i32, i32
  }
  func.func @transform_4(%arg0: i32) -> (i32, i32, i32) {
    %c0_i32 = arith.constant 0 : i32
    %c0_i32_0 = arith.constant 0 : i32
    %c0_i32_1 = arith.constant 0 : i32
    return %arg0, %c0_i32, %c0_i32_0 : i32, i32, i32
  }
}

</mosaic_0001>

<llo_original>
// kernel: tpu_custom_call.1
$region0: #{tpu_custom_call.1}
  #allocation0 [shape = 'u32[]', space=smem, size = 0x4, offset = 0x4, fixed_abs, tag = 'smem constant byte address 0x4 - core index']
  #allocation1 [shape = 'u32[72,128]{1,0:T(1,128)}', space=vmem, size = 0x9000, scoped, tag = 'internal scratch']
  #allocation2 [shape = 'f32[144,32]{1,0:T(8,128)}', space=vmem, size = 0x12000, scoped, tag = 'scratch operand']
  %s0 = inlined_call_operand.vmem [shape: f32[240,32], index: 0, kind: input, shape index: {}]
  %s1 = inlined_call_operand.vmem [shape: f32[240,32], index: 1, kind: input, shape index: {}]
  %s2 = inlined_call_operand.vmem [shape: f32[4,32,8], index: 2, kind: input, shape index: {}]
  %s3 = inlined_call_operand.vmem [shape: f32[15,1,8], index: 3, kind: input, shape index: {}]
  %s4 = inlined_call_operand.vmem [shape: f32[15,8,8], index: 4, kind: output, shape index: {}]
  %s5 = sld [smem:[#allocation0]]
  $region26: #{tpu_custom_call.1} parent=0
    _
  %s7 = ssub.s32 1, %s5
  %s8 = scalar_select 0, %s7, %s5
  // Predicated region
  $region2: #{tpu_custom_call.1} parent=0 // pred_check
    _
  $region3: #{tpu_custom_call.1} parent=0 // pred_check_branch
    %10 = sbr.rel (0) target = $region5
  $region4: #{tpu_custom_call.1} parent=0 // pred_region
    _
  $region5: #{tpu_custom_call.1} parent=0 // pred_fallthru
    _
  // Predicated region
  $region6: #{tpu_custom_call.1} parent=0 // pred_check
    _
  $region7: #{tpu_custom_call.1} parent=0 // pred_check_branch
    %12 = sbr.rel (0) target = $region9
  $region8: #{tpu_custom_call.1} parent=0 // pred_region
    %s13 = sadd.s32 0, 1
    %s14 = smul.u32 %s13, 5
    %s15 = smul.u32 3, %s14
    %p16 = scmp.lt.s32.totalorder %s15, 29
    %s17 = scalar_select %p16, %s15, 29
    %s18 = smul.addr %s17, 8
    %s19 = scalar_lea.vmem %s1, %s18
    %s20 = sadd.s32 0, 1
    %s21 = smul.u32 %s20, 5
    %s22 = smul.u32 3, %s21
  $region9: #{tpu_custom_call.1} parent=0 // pred_fallthru
    _
  // Predicated region
  $region10: #{tpu_custom_call.1} parent=0 // pred_check
    _
  $region11: #{tpu_custom_call.1} parent=0 // pred_check_branch
    %24 = sbr.rel (0) target = $region13
  $region12: #{tpu_custom_call.1} parent=0 // pred_region
    _
  $region13: #{tpu_custom_call.1} parent=0 // pred_fallthru
    _
  // Predicated region
  $region14: #{tpu_custom_call.1} parent=0 // pred_check
    _
  $region15: #{tpu_custom_call.1} parent=0 // pred_check_branch
    %26 = sbr.rel (0) target = $region17
  $region16: #{tpu_custom_call.1} parent=0 // pred_region
    _
  $region17: #{tpu_custom_call.1} parent=0 // pred_fallthru
    _
  %s27 = sadd.s32 0, 1
  %s28 = smul.u32 %s27, 5
  %s29 = smul.u32 3, %s28
  %p30 = scmp.lt.s32.totalorder %s29, 29
  %s31 = scalar_select %p30, %s29, 29
  %s32 = smul.addr %s31, 8
  %s33 = scalar_lea.vmem %s1, %s32
  %s34 = sadd.s32 0, 1
  %s35 = smul.u32 %s34, 5
  %s36 = smul.u32 3, %s35
  %p37 = scmp.lt.s32.totalorder %s36, 29
  %s38 = scalar_select %p37, %s36, 29
  %s39 = smul.addr %s38, 8
  %s40 = scalar_lea.vmem %s1, %s39
  %s41 = sadd.s32 0, 1
  %s42 = smul.u32 %s41, 5
  %s43 = smul.u32 3, %s42
  %v44 = vld [vmem:[%s0] sm:$0xff]
  %v45 = vld [vmem:[%s0 + $0x8] sm:$0xff]
  %v46 = vld [vmem:[%s0 + $0x10] sm:$0xff]
  %v47 = vld [vmem:[%s0 + $0x18] sm:$0xff]
  %v48 = vld [vmem:[%s0 + $0x20] sm:$0xff]
  %v49 = vld [vmem:[%s0 + $0x28] sm:$0xff]
  %v50 = vld [vmem:[%s0 + $0x30] sm:$0xff]
  %v51 = vld [vmem:[%s0 + $0x38] sm:$0xff]
  %v52 = vld [vmem:[%s0 + $0x40] sm:$0xff]
  %v53 = vld [vmem:[%s0 + $0x48] sm:$0xff]
  %v54 = vld [vmem:[%s0 + $0x50] sm:$0xff]
  %v55 = vld [vmem:[%s0 + $0x58] sm:$0xff]
  %v56 = vld [vmem:[%s0 + $0x60] sm:$0xff]
  %v57 = vld [vmem:[%s0 + $0x68] sm:$0xff]
  %v58 = vld [vmem:[%s0 + $0x70] sm:$0xff]
  %vm59 = vcmask 261120
  %60 = vst.msk [vmem:[#allocation2] sm:$0xff] %vm59, %v44
  %61 = vst.msk [vmem:[#allocation2 + $0x8] sm:$0xff] %vm59, %v45
  %62 = vst.msk [vmem:[#allocation2 + $0x10] sm:$0xff] %vm59, %v46
  %63 = vst.msk [vmem:[#allocation2 + $0x18] sm:$0xff] %vm59, %v47
  %64 = vst.msk [vmem:[#allocation2 + $0x20] sm:$0xff] %vm59, %v48
  %65 = vst.msk [vmem:[#allocation2 + $0x28] sm:$0xff] %vm59, %v49
  %66 = vst.msk [vmem:[#allocation2 + $0x30] sm:$0xff] %vm59, %v50
  %67 = vst.msk [vmem:[#allocation2 + $0x38] sm:$0xff] %vm59, %v51
  %68 = vst.msk [vmem:[#allocation2 + $0x40] sm:$0xff] %vm59, %v52
  %69 = vst.msk [vmem:[#allocation2 + $0x48] sm:$0xff] %vm59, %v53
  %70 = vst.msk [vmem:[#allocation2 + $0x50] sm:$0xff] %vm59, %v54
  %71 = vst.msk [vmem:[#allocation2 + $0x58] sm:$0xff] %vm59, %v55
  %72 = vst.msk [vmem:[#allocation2 + $0x60] sm:$0xff] %vm59, %v56
  %73 = vst.msk [vmem:[#allocation2 + $0x68] sm:$0xff] %vm59, %v57
  %74 = vst.msk [vmem:[#allocation2 + $0x70] sm:$0xff] %vm59, %v58
  %v75 = vld [vmem:[%s40] sm:$0xff]
  %v76 = vld [vmem:[%s40 + $0x8] sm:$0xff]
  %v77 = vld [vmem:[%s40 + $0x10] sm:$0xff]
  %78 = vst.msk [vmem:[#allocation2 + $0x78] sm:$0xff] %vm59, %v75
  %79 = vst.msk [vmem:[#allocation2 + $0x80] sm:$0xff] %vm59, %v76
  %80 = vst.msk [vmem:[#allocation2 + $0x88] sm:$0xff] %vm59, %v77
  %v81 = vld [vmem:[#allocation2] sm:$0xff]
  %v82 = vld [vmem:[#allocation2 + $0x8] sm:$0xff]
  %v83 = vld [vmem:[#allocation2 + $0x10] sm:$0xff]
  %v84 = vld [vmem:[#allocation2 + $0x18] sm:$0xff]
  %v85 = vld [vmem:[#allocation2 + $0x20] sm:$0xff]
  %v86 = vld [vmem:[#allocation2 + $0x28] sm:$0xff]
  %v87 = vld [vmem:[#allocation2 + $0x30] sm:$0xff]
  %v88 = vld [vmem:[#allocation2 + $0x38] sm:$0xff]
  %v89 = vld [vmem:[#allocation2 + $0x40] sm:$0xff]
  %v90 = vld [vmem:[#allocation2 + $0x48] sm:$0xff]
  %v91 = vld [vmem:[#allocation2 + $0x50] sm:$0xff]
  %v92 = vld [vmem:[#allocation2 + $0x58] sm:$0xff]
  %v93 = vld [vmem:[#allocation2 + $0x60] sm:$0xff]
  %v94 = vld [vmem:[#allocation2 + $0x68] sm:$0xff]
  %v95 = vld [vmem:[#allocation2 + $0x70] sm:$0xff]
  %s96 = scalar_lea.vmem %s2, 96
  %v97 = vld [vmem:[%s96] sm:$0xff]
  %v98 = vld [vmem:[%s96 + $0x8] sm:$0xff]
  %v99 = vld [vmem:[%s96 + $0x10] sm:$0xff]
  %v100 = vld [vmem:[%s96 + $0x18] sm:$0xff]
  %v102 = vsel %vm59, %v81, 0
  %v105 = vsel %vm59, %v82, 0
  %v108 = vsel %vm59, %v83, 0
  %v111 = vsel %vm59, %v84, 0
  %v114 = vsel %vm59, %v85, 0
  %v117 = vsel %vm59, %v86, 0
  %v120 = vsel %vm59, %v87, 0
  %v123 = vsel %vm59, %v88, 0
  %v126 = vsel %vm59, %v89, 0
  %v129 = vsel %vm59, %v90, 0
  %v132 = vsel %vm59, %v91, 0
  %v135 = vsel %vm59, %v92, 0
  %v138 = vsel %vm59, %v93, 0
  %v141 = vsel %vm59, %v94, 0
  %v144 = vsel %vm59, %v95, 0
  %146 = vmatpush.msra.mxu0 0.0
  %147 = vmatpush.msra.mxu0 0.0
  %148 = vmatpush.msra.mxu0 0.0
  %149 = vmatpush.msra.mxu0 0.0
  %150 = vmatpush.msra.mxu0 0.0
  %151 = vmatpush.msra.mxu0 0.0
  %152 = vmatpush.msra.mxu0 0.0
  %153 = vmatpush.msra.mxu0 0.0
  %154 = vmatpush.msra.mxu0 0.0
  %155 = vmatpush.msra.mxu0 0.0
  %156 = vmatpush.msra.mxu0 0.0
  %157 = vmatpush.msra.mxu0 0.0
  %158 = vmatpush.msra.mxu0 %v100
  %159 = vmatpush.msra.mxu0 %v99
  %160 = vmatpush.msra.mxu0 %v98
  %161 = vmatpush.msra.mxu0 %v97
  %162 = vmatmul.f32.gmra.mxu0 %v102
  %v163 = vpop.f32.mrf.mxu0
  %v164 = vadd.f32 0.0, %v163
  %165 = vmatmul.f32.gmra.mxu0 %v105
  %v166 = vpop.f32.mrf.mxu0
  %v167 = vadd.f32 0.0, %v166
  %168 = vmatmul.f32.gmra.mxu0 %v108
  %v169 = vpop.f32.mrf.mxu0
  %v170 = vadd.f32 0.0, %v169
  %171 = vmatmul.f32.gmra.mxu0 %v111
  %v172 = vpop.f32.mrf.mxu0
  %v173 = vadd.f32 0.0, %v172
  %174 = vmatmul.f32.gmra.mxu0 %v114
  %v175 = vpop.f32.mrf.mxu0
  %v176 = vadd.f32 0.0, %v175
  %177 = vmatmul.f32.gmra.mxu0 %v117
  %v178 = vpop.f32.mrf.mxu0
  %v179 = vadd.f32 0.0, %v178
  %180 = vmatmul.f32.gmra.mxu0 %v120
  %v181 = vpop.f32.mrf.mxu0
  %v182 = vadd.f32 0.0, %v181
  %183 = vmatmul.f32.gmra.mxu0 %v123
  %v184 = vpop.f32.mrf.mxu0
  %v185 = vadd.f32 0.0, %v184
  %186 = vmatmul.f32.gmra.mxu0 %v126
  %v187 = vpop.f32.mrf.mxu0
  %v188 = vadd.f32 0.0, %v187
  %189 = vmatmul.f32.gmra.mxu0 %v129
  %v190 = vpop.f32.mrf.mxu0
  %v191 = vadd.f32 0.0, %v190
  %192 = vmatmul.f32.gmra.mxu0 %v132
  %v193 = vpop.f32.mrf.mxu0
  %v194 = vadd.f32 0.0, %v193
  %195 = vmatmul.f32.gmra.mxu0 %v135
  %v196 = vpop.f32.mrf.mxu0
  %v197 = vadd.f32 0.0, %v196
  %198 = vmatmul.f32.gmra.mxu0 %v138
  %v199 = vpop.f32.mrf.mxu0
  %v200 = vadd.f32 0.0, %v199
  %201 = vmatmul.f32.gmra.mxu0 %v141
  %v202 = vpop.f32.mrf.mxu0
  %v203 = vadd.f32 0.0, %v202
  %204 = vmatmul.f32.gmra.mxu0 %v144
  %v205 = vpop.f32.mrf.mxu0
  %v206 = vadd.f32 0.0, %v205
  %207 = vdwg.mxu0
  %vm208 = vcmask 64512
  %209 = vst.msk [vmem:[%s4] sm:$0xff] %vm208, %v164
  %210 = vst.msk [vmem:[%s4 + $0x8] sm:$0xff] %vm208, %v167
  %211 = vst.msk [vmem:[%s4 + $0x10] sm:$0xff] %vm208, %v170
  %212 = vst.msk [vmem:[%s4 + $0x18] sm:$0xff] %vm208, %v173
  %213 = vst.msk [vmem:[%s4 + $0x20] sm:$0xff] %vm208, %v176
  %214 = vst.msk [vmem:[%s4 + $0x28] sm:$0xff] %vm208, %v179
  %215 = vst.msk [vmem:[%s4 + $0x30] sm:$0xff] %vm208, %v182
  %216 = vst.msk [vmem:[%s4 + $0x38] sm:$0xff] %vm208, %v185
  %217 = vst.msk [vmem:[%s4 + $0x40] sm:$0xff] %vm208, %v188
  %218 = vst.msk [vmem:[%s4 + $0x48] sm:$0xff] %vm208, %v191
  %219 = vst.msk [vmem:[%s4 + $0x50] sm:$0xff] %vm208, %v194
  %220 = vst.msk [vmem:[%s4 + $0x58] sm:$0xff] %vm208, %v197
  %221 = vst.msk [vmem:[%s4 + $0x60] sm:$0xff] %vm208, %v200
  %222 = vst.msk [vmem:[%s4 + $0x68] sm:$0xff] %vm208, %v203
  %223 = vst.msk [vmem:[%s4 + $0x70] sm:$0xff] %vm208, %v206
  %v224 = vld [vmem:[#allocation2 + $0x8] sm:$0xff]
  %v225 = vld [vmem:[#allocation2 + $0x10] sm:$0xff]
  %v226 = vld [vmem:[#allocation2 + $0x18] sm:$0xff]
  %v227 = vld [vmem:[#allocation2 + $0x20] sm:$0xff]
  %v228 = vld [vmem:[#allocation2 + $0x28] sm:$0xff]
  %v229 = vld [vmem:[#allocation2 + $0x30] sm:$0xff]
  %v230 = vld [vmem:[#allocation2 + $0x38] sm:$0xff]
  %v231 = vld [vmem:[#allocation2 + $0x40] sm:$0xff]
  %v232 = vld [vmem:[#allocation2 + $0x48] sm:$0xff]
  %v233 = vld [vmem:[#allocation2 + $0x50] sm:$0xff]
  %v234 = vld [vmem:[#allocation2 + $0x58] sm:$0xff]
  %v235 = vld [vmem:[#allocation2 + $0x60] sm:$0xff]
  %v236 = vld [vmem:[#allocation2 + $0x68] sm:$0xff]
  %v237 = vld [vmem:[#allocation2 + $0x70] sm:$0xff]
  %v238 = vld [vmem:[#allocation2 + $0x78] sm:$0xff]
  %s239 = scalar_lea.vmem %s2, 64
  %v240 = vld [vmem:[%s239] sm:$0xff]
  %v241 = vld [vmem:[%s239 + $0x8] sm:$0xff]
  %v242 = vld [vmem:[%s239 + $0x10] sm:$0xff]
  %v243 = vld [vmem:[%s239 + $0x18] sm:$0xff]
  %v245 = vsel %vm59, %v224, 0
  %v248 = vsel %vm59, %v225, 0
  %v251 = vsel %vm59, %v226, 0
  %v254 = vsel %vm59, %v227, 0
  %v257 = vsel %vm59, %v228, 0
  %v260 = vsel %vm59, %v229, 0
  %v263 = vsel %vm59, %v230, 0
  %v266 = vsel %vm59, %v231, 0
  %v269 = vsel %vm59, %v232, 0
  %v272 = vsel %vm59, %v233, 0
  %v275 = vsel %vm59, %v234, 0
  %v278 = vsel %vm59, %v235, 0
  %v281 = vsel %vm59, %v236, 0
  %v284 = vsel %vm59, %v237, 0
  %v287 = vsel %vm59, %v238, 0
  %289 = vmatpush.msra.mxu0 0.0
  %290 = vmatpush.msra.mxu0 0.0
  %291 = vmatpush.msra.mxu0 0.0
  %292 = vmatpush.msra.mxu0 0.0
  %293 = vmatpush.msra.mxu0 0.0
  %294 = vmatpush.msra.mxu0 0.0
  %295 = vmatpush.msra.mxu0 0.0
  %296 = vmatpush.msra.mxu0 0.0
  %297 = vmatpush.msra.mxu0 0.0
  %298 = vmatpush.msra.mxu0 0.0
  %299 = vmatpush.msra.mxu0 0.0
  %300 = vmatpush.msra.mxu0 0.0
  %301 = vmatpush.msra.mxu0 %v243
  %302 = vmatpush.msra.mxu0 %v242
  %303 = vmatpush.msra.mxu0 %v241
  %304 = vmatpush.msra.mxu0 %v240
  %305 = vmatmul.f32.gmra.mxu0 %v245
  %v306 = vpop.f32.mrf.mxu0
  %v307 = vadd.f32 0.0, %v306
  %308 = vmatmul.f32.gmra.mxu0 %v248
  %v309 = vpop.f32.mrf.mxu0
  %v310 = vadd.f32 0.0, %v309
  %311 = vmatmul.f32.gmra.mxu0 %v251
  %v312 = vpop.f32.mrf.mxu0
  %v313 = vadd.f32 0.0, %v312
  %314 = vmatmul.f32.gmra.mxu0 %v254
  %v315 = vpop.f32.mrf.mxu0
  %v316 = vadd.f32 0.0, %v315
  %317 = vmatmul.f32.gmra.mxu0 %v257
  %v318 = vpop.f32.mrf.mxu0
  %v319 = vadd.f32 0.0, %v318
  %320 = vmatmul.f32.gmra.mxu0 %v260
  %v321 = vpop.f32.mrf.mxu0
  %v322 = vadd.f32 0.0, %v321
  %323 = vmatmul.f32.gmra.mxu0 %v263
  %v324 = vpop.f32.mrf.mxu0
  %v325 = vadd.f32 0.0, %v324
  %326 = vmatmul.f32.gmra.mxu0 %v266
  %v327 = vpop.f32.mrf.mxu0
  %v328 = vadd.f32 0.0, %v327
  %329 = vmatmul.f32.gmra.mxu0 %v269
  %v330 = vpop.f32.mrf.mxu0
  %v331 = vadd.f32 0.0, %v330
  %332 = vmatmul.f32.gmra.mxu0 %v272
  %v333 = vpop.f32.mrf.mxu0
  %v334 = vadd.f32 0.0, %v333
  %335 = vmatmul.f32.gmra.mxu0 %v275
  %v336 = vpop.f32.mrf.mxu0
  %v337 = vadd.f32 0.0, %v336
  %338 = vmatmul.f32.gmra.mxu0 %v278
  %v339 = vpop.f32.mrf.mxu0
  %v340 = vadd.f32 0.0, %v339
  %341 = vmatmul.f32.gmra.mxu0 %v281
  %v342 = vpop.f32.mrf.mxu0
  %v343 = vadd.f32 0.0, %v342
  %344 = vmatmul.f32.gmra.mxu0 %v284
  %v345 = vpop.f32.mrf.mxu0
  %v346 = vadd.f32 0.0, %v345
  %347 = vmatmul.f32.gmra.mxu0 %v287
  %v348 = vpop.f32.mrf.mxu0
  %v349 = vadd.f32 0.0, %v348
  %350 = vdwg.mxu0
  %v351 = vld [vmem:[%s4] sm:$0xff]
  %v352 = vld [vmem:[%s4 + $0x8] sm:$0xff]
  %v353 = vld [vmem:[%s4 + $0x10] sm:$0xff]
  %v354 = vld [vmem:[%s4 + $0x18] sm:$0xff]
  %v355 = vld [vmem:[%s4 + $0x20] sm:$0xff]
  %v356 = vld [vmem:[%s4 + $0x28] sm:$0xff]
  %v357 = vld [vmem:[%s4 + $0x30] sm:$0xff]
  %v358 = vld [vmem:[%s4 + $0x38] sm:$0xff]
  %v359 = vld [vmem:[%s4 + $0x40] sm:$0xff]
  %v360 = vld [vmem:[%s4 + $0x48] sm:$0xff]
  %v361 = vld [vmem:[%s4 + $0x50] sm:$0xff]
  %v362 = vld [vmem:[%s4 + $0x58] sm:$0xff]
  %v363 = vld [vmem:[%s4 + $0x60] sm:$0xff]
  %v364 = vld [vmem:[%s4 + $0x68] sm:$0xff]
  %v365 = vld [vmem:[%s4 + $0x70] sm:$0xff]
  %v366 = vadd.f32 %v351, %v307
  %v367 = vadd.f32 %v352, %v310
  %v368 = vadd.f32 %v353, %v313
  %v369 = vadd.f32 %v354, %v316
  %v370 = vadd.f32 %v355, %v319
  %v371 = vadd.f32 %v356, %v322
  %v372 = vadd.f32 %v357, %v325
  %v373 = vadd.f32 %v358, %v328
  %v374 = vadd.f32 %v359, %v331
  %v375 = vadd.f32 %v360, %v334
  %v376 = vadd.f32 %v361, %v337
  %v377 = vadd.f32 %v362, %v340
  %v378 = vadd.f32 %v363, %v343
  %v379 = vadd.f32 %v364, %v346
  %v380 = vadd.f32 %v365, %v349
  %381 = vst.msk [vmem:[%s4] sm:$0xff] %vm208, %v366
  %382 = vst.msk [vmem:[%s4 + $0x8] sm:$0xff] %vm208, %v367
  %383 = vst.msk [vmem:[%s4 + $0x10] sm:$0xff] %vm208, %v368
  %384 = vst.msk [vmem:[%s4 + $0x18] sm:$0xff] %vm208, %v369
  %385 = vst.msk [vmem:[%s4 + $0x20] sm:$0xff] %vm208, %v370
  %386 = vst.msk [vmem:[%s4 + $0x28] sm:$0xff] %vm208, %v371
  %387 = vst.msk [vmem:[%s4 + $0x30] sm:$0xff] %vm208, %v372
  %388 = vst.msk [vmem:[%s4 + $0x38] sm:$0xff] %vm208, %v373
  %389 = vst.msk [vmem:[%s4 + $0x40] sm:$0xff] %vm208, %v374
  %390 = vst.msk [vmem:[%s4 + $0x48] sm:$0xff] %vm208, %v375
  %391 = vst.msk [vmem:[%s4 + $0x50] sm:$0xff] %vm208, %v376
  %392 = vst.msk [vmem:[%s4 + $0x58] sm:$0xff] %vm208, %v377
  %393 = vst.msk [vmem:[%s4 + $0x60] sm:$0xff] %vm208, %v378
  %394 = vst.msk [vmem:[%s4 + $0x68] sm:$0xff] %vm208, %v379
  %395 = vst.msk [vmem:[%s4 + $0x70] sm:$0xff] %vm208, %v380
  %v396 = vld [vmem:[#allocation2 + $0x10] sm:$0xff]
  %v397 = vld [vmem:[#allocation2 + $0x18] sm:$0xff]
  %v398 = vld [vmem:[#allocation2 + $0x20] sm:$0xff]
  %v399 = vld [vmem:[#allocation2 + $0x28] sm:$0xff]
  %v400 = vld [vmem:[#allocation2 + $0x30] sm:$0xff]
  %v401 = vld [vmem:[#allocation2 + $0x38] sm:$0xff]
  %v402 = vld [vmem:[#allocation2 + $0x40] sm:$0xff]
  %v403 = vld [vmem:[#allocation2 + $0x48] sm:$0xff]
  %v404 = vld [vmem:[#allocation2 + $0x50] sm:$0xff]
  %v405 = vld [vmem:[#allocation2 + $0x58] sm:$0xff]
  %v406 = vld [vmem:[#allocation2 + $0x60] sm:$0xff]
  %v407 = vld [vmem:[#allocation2 + $0x68] sm:$0xff]
  %v408 = vld [vmem:[#allocation2 + $0x70] sm:$0xff]
  %v409 = vld [vmem:[#allocation2 + $0x78] sm:$0xff]
  %v410 = vld [vmem:[#allocation2 + $0x80] sm:$0xff]
  %s411 = scalar_lea.vmem %s2, 32
  %v412 = vld [vmem:[%s411] sm:$0xff]
  %v413 = vld [vmem:[%s411 + $0x8] sm:$0xff]
  %v414 = vld [vmem:[%s411 + $0x10] sm:$0xff]
  %v415 = vld [vmem:[%s411 + $0x18] sm:$0xff]
  %v417 = vsel %vm59, %v396, 0
  %v420 = vsel %vm59, %v397, 0
  %v423 = vsel %vm59, %v398, 0
  %v426 = vsel %vm59, %v399, 0
  %v429 = vsel %vm59, %v400, 0
  %v432 = vsel %vm59, %v401, 0
  %v435 = vsel %vm59, %v402, 0
  %v438 = vsel %vm59, %v403, 0
  %v441 = vsel %vm59, %v404, 0
  %v444 = vsel %vm59, %v405, 0
  %v447 = vsel %vm59, %v406, 0
  %v450 = vsel %vm59, %v407, 0
  %v453 = vsel %vm59, %v408, 0
  %v456 = vsel %vm59, %v409, 0
  %v459 = vsel %vm59, %v410, 0
  %461 = vmatpush.msra.mxu0 0.0
  %462 = vmatpush.msra.mxu0 0.0
  %463 = vmatpush.msra.mxu0 0.0
  %464 = vmatpush.msra.mxu0 0.0
  %465 = vmatpush.msra.mxu0 0.0
  %466 = vmatpush.msra.mxu0 0.0
  %467 = vmatpush.msra.mxu0 0.0
  %468 = vmatpush.msra.mxu0 0.0
  %469 = vmatpush.msra.mxu0 0.0
  %470 = vmatpush.msra.mxu0 0.0
  %471 = vmatpush.msra.mxu0 0.0
  %472 = vmatpush.msra.mxu0 0.0
  %473 = vmatpush.msra.mxu0 %v415
  %474 = vmatpush.msra.mxu0 %v414
  %475 = vmatpush.msra.mxu0 %v413
  %476 = vmatpush.msra.mxu0 %v412
  %477 = vmatmul.f32.gmra.mxu0 %v417
  %v478 = vpop.f32.mrf.mxu0
  %v479 = vadd.f32 0.0, %v478
  %480 = vmatmul.f32.gmra.mxu0 %v420
  %v481 = vpop.f32.mrf.mxu0
  %v482 = vadd.f32 0.0, %v481
  %483 = vmatmul.f32.gmra.mxu0 %v423
  %v484 = vpop.f32.mrf.mxu0
  %v485 = vadd.f32 0.0, %v484
  %486 = vmatmul.f32.gmra.mxu0 %v426
  %v487 = vpop.f32.mrf.mxu0
  %v488 = vadd.f32 0.0, %v487
  %489 = vmatmul.f32.gmra.mxu0 %v429
  %v490 = vpop.f32.mrf.mxu0
  %v491 = vadd.f32 0.0, %v490
  %492 = vmatmul.f32.gmra.mxu0 %v432
  %v493 = vpop.f32.mrf.mxu0
  %v494 = vadd.f32 0.0, %v493
  %495 = vmatmul.f32.gmra.mxu0 %v435
  %v496 = vpop.f32.mrf.mxu0
  %v497 = vadd.f32 0.0, %v496
  %498 = vmatmul.f32.gmra.mxu0 %v438
  %v499 = vpop.f32.mrf.mxu0
  %v500 = vadd.f32 0.0, %v499
  %501 = vmatmul.f32.gmra.mxu0 %v441
  %v502 = vpop.f32.mrf.mxu0
  %v503 = vadd.f32 0.0, %v502
  %504 = vmatmul.f32.gmra.mxu0 %v444
  %v505 = vpop.f32.mrf.mxu0
  %v506 = vadd.f32 0.0, %v505
  %507 = vmatmul.f32.gmra.mxu0 %v447
  %v508 = vpop.f32.mrf.mxu0
  %v509 = vadd.f32 0.0, %v508
  %510 = vmatmul.f32.gmra.mxu0 %v450
  %v511 = vpop.f32.mrf.mxu0
  %v512 = vadd.f32 0.0, %v511
  %513 = vmatmul.f32.gmra.mxu0 %v453
  %v514 = vpop.f32.mrf.mxu0
  %v515 = vadd.f32 0.0, %v514
  %516 = vmatmul.f32.gmra.mxu0 %v456
  %v517 = vpop.f32.mrf.mxu0
  %v518 = vadd.f32 0.0, %v517
  %519 = vmatmul.f32.gmra.mxu0 %v459
  %v520 = vpop.f32.mrf.mxu0
  %v521 = vadd.f32 0.0, %v520
  %522 = vdwg.mxu0
  %v523 = vld [vmem:[%s4] sm:$0xff]
  %v524 = vld [vmem:[%s4 + $0x8] sm:$0xff]
  %v525 = vld [vmem:[%s4 + $0x10] sm:$0xff]
  %v526 = vld [vmem:[%s4 + $0x18] sm:$0xff]
  %v527 = vld [vmem:[%s4 + $0x20] sm:$0xff]
  %v528 = vld [vmem:[%s4 + $0x28] sm:$0xff]
  %v529 = vld [vmem:[%s4 + $0x30] sm:$0xff]
  %v530 = vld [vmem:[%s4 + $0x38] sm:$0xff]
  %v531 = vld [vmem:[%s4 + $0x40] sm:$0xff]
  %v532 = vld [vmem:[%s4 + $0x48] sm:$0xff]
  %v533 = vld [vmem:[%s4 + $0x50] sm:$0xff]
  %v534 = vld [vmem:[%s4 + $0x58] sm:$0xff]
  %v535 = vld [vmem:[%s4 + $0x60] sm:$0xff]
  %v536 = vld [vmem:[%s4 + $0x68] sm:$0xff]
  %v537 = vld [vmem:[%s4 + $0x70] sm:$0xff]
  %v538 = vadd.f32 %v523, %v479
  %v539 = vadd.f32 %v524, %v482
  %v540 = vadd.f32 %v525, %v485
  %v541 = vadd.f32 %v526, %v488
  %v542 = vadd.f32 %v527, %v491
  %v543 = vadd.f32 %v528, %v494
  %v544 = vadd.f32 %v529, %v497
  %v545 = vadd.f32 %v530, %v500
  %v546 = vadd.f32 %v531, %v503
  %v547 = vadd.f32 %v532, %v506
  %v548 = vadd.f32 %v533, %v509
  %v549 = vadd.f32 %v534, %v512
  %v550 = vadd.f32 %v535, %v515
  %v551 = vadd.f32 %v536, %v518
  %v552 = vadd.f32 %v537, %v521
  %553 = vst.msk [vmem:[%s4] sm:$0xff] %vm208, %v538
  %554 = vst.msk [vmem:[%s4 + $0x8] sm:$0xff] %vm208, %v539
  %555 = vst.msk [vmem:[%s4 + $0x10] sm:$0xff] %vm208, %v540
  %556 = vst.msk [vmem:[%s4 + $0x18] sm:$0xff] %vm208, %v541
  %557 = vst.msk [vmem:[%s4 + $0x20] sm:$0xff] %vm208, %v542
  %558 = vst.msk [vmem:[%s4 + $0x28] sm:$0xff] %vm208, %v543
  %559 = vst.msk [vmem:[%s4 + $0x30] sm:$0xff] %vm208, %v544
  %560 = vst.msk [vmem:[%s4 + $0x38] sm:$0xff] %vm208, %v545
  %561 = vst.msk [vmem:[%s4 + $0x40] sm:$0xff] %vm208, %v546
  %562 = vst.msk [vmem:[%s4 + $0x48] sm:$0xff] %vm208, %v547
  %563 = vst.msk [vmem:[%s4 + $0x50] sm:$0xff] %vm208, %v548
  %564 = vst.msk [vmem:[%s4 + $0x58] sm:$0xff] %vm208, %v549
  %565 = vst.msk [vmem:[%s4 + $0x60] sm:$0xff] %vm208, %v550
  %566 = vst.msk [vmem:[%s4 + $0x68] sm:$0xff] %vm208, %v551
  %567 = vst.msk [vmem:[%s4 + $0x70] sm:$0xff] %vm208, %v552
  %v568 = vld [vmem:[#allocation2 + $0x18] sm:$0xff]
  %v569 = vld [vmem:[#allocation2 + $0x20] sm:$0xff]
  %v570 = vld [vmem:[#allocation2 + $0x28] sm:$0xff]
  %v571 = vld [vmem:[#allocation2 + $0x30] sm:$0xff]
  %v572 = vld [vmem:[#allocation2 + $0x38] sm:$0xff]
  %v573 = vld [vmem:[#allocation2 + $0x40] sm:$0xff]
  %v574 = vld [vmem:[#allocation2 + $0x48] sm:$0xff]
  %v575 = vld [vmem:[#allocation2 + $0x50] sm:$0xff]
  %v576 = vld [vmem:[#allocation2 + $0x58] sm:$0xff]
  %v577 = vld [vmem:[#allocation2 + $0x60] sm:$0xff]
  %v578 = vld [vmem:[#allocation2 + $0x68] sm:$0xff]
  %v579 = vld [vmem:[#allocation2 + $0x70] sm:$0xff]
  %v580 = vld [vmem:[#allocation2 + $0x78] sm:$0xff]
  %v581 = vld [vmem:[#allocation2 + $0x80] sm:$0xff]
  %v582 = vld [vmem:[#allocation2 + $0x88] sm:$0xff]
  %v583 = vld [vmem:[%s2] sm:$0xff]
  %v584 = vld [vmem:[%s2 + $0x8] sm:$0xff]
  %v585 = vld [vmem:[%s2 + $0x10] sm:$0xff]
  %v586 = vld [vmem:[%s2 + $0x18] sm:$0xff]
  %v588 = vsel %vm59, %v568, 0
  %v591 = vsel %vm59, %v569, 0
  %v594 = vsel %vm59, %v570, 0
  %v597 = vsel %vm59, %v571, 0
  %v600 = vsel %vm59, %v572, 0
  %v603 = vsel %vm59, %v573, 0
  %v606 = vsel %vm59, %v574, 0
  %v609 = vsel %vm59, %v575, 0
  %v612 = vsel %vm59, %v576, 0
  %v615 = vsel %vm59, %v577, 0
  %v618 = vsel %vm59, %v578, 0
  %v621 = vsel %vm59, %v579, 0
  %v624 = vsel %vm59, %v580, 0
  %v627 = vsel %vm59, %v581, 0
  %v630 = vsel %vm59, %v582, 0
  %632 = vmatpush.msra.mxu0 0.0
  %633 = vmatpush.msra.mxu0 0.0
  %634 = vmatpush.msra.mxu0 0.0
  %635 = vmatpush.msra.mxu0 0.0
  %636 = vmatpush.msra.mxu0 0.0
  %637 = vmatpush.msra.mxu0 0.0
  %638 = vmatpush.msra.mxu0 0.0
  %639 = vmatpush.msra.mxu0 0.0
  %640 = vmatpush.msra.mxu0 0.0
  %641 = vmatpush.msra.mxu0 0.0
  %642 = vmatpush.msra.mxu0 0.0
  %643 = vmatpush.msra.mxu0 0.0
  %644 = vmatpush.msra.mxu0 %v586
  %645 = vmatpush.msra.mxu0 %v585
  %646 = vmatpush.msra.mxu0 %v584
  %647 = vmatpush.msra.mxu0 %v583
  %648 = vmatmul.f32.gmra.mxu0 %v588
  %v649 = vpop.f32.mrf.mxu0
  %v650 = vadd.f32 0.0, %v649
  %651 = vmatmul.f32.gmra.mxu0 %v591
  %v652 = vpop.f32.mrf.mxu0
  %v653 = vadd.f32 0.0, %v652
  %654 = vmatmul.f32.gmra.mxu0 %v594
  %v655 = vpop.f32.mrf.mxu0
  %v656 = vadd.f32 0.0, %v655
  %657 = vmatmul.f32.gmra.mxu0 %v597
  %v658 = vpop.f32.mrf.mxu0
  %v659 = vadd.f32 0.0, %v658
  %660 = vmatmul.f32.gmra.mxu0 %v600
  %v661 = vpop.f32.mrf.mxu0
  %v662 = vadd.f32 0.0, %v661
  %663 = vmatmul.f32.gmra.mxu0 %v603
  %v664 = vpop.f32.mrf.mxu0
  %v665 = vadd.f32 0.0, %v664
  %666 = vmatmul.f32.gmra.mxu0 %v606
  %v667 = vpop.f32.mrf.mxu0
  %v668 = vadd.f32 0.0, %v667
  %669 = vmatmul.f32.gmra.mxu0 %v609
  %v670 = vpop.f32.mrf.mxu0
  %v671 = vadd.f32 0.0, %v670
  %672 = vmatmul.f32.gmra.mxu0 %v612
  %v673 = vpop.f32.mrf.mxu0
  %v674 = vadd.f32 0.0, %v673
  %675 = vmatmul.f32.gmra.mxu0 %v615
  %v676 = vpop.f32.mrf.mxu0
  %v677 = vadd.f32 0.0, %v676
  %678 = vmatmul.f32.gmra.mxu0 %v618
  %v679 = vpop.f32.mrf.mxu0
  %v680 = vadd.f32 0.0, %v679
  %681 = vmatmul.f32.gmra.mxu0 %v621
  %v682 = vpop.f32.mrf.mxu0
  %v683 = vadd.f32 0.0, %v682
  %684 = vmatmul.f32.gmra.mxu0 %v624
  %v685 = vpop.f32.mrf.mxu0
  %v686 = vadd.f32 0.0, %v685
  %687 = vmatmul.f32.gmra.mxu0 %v627
  %v688 = vpop.f32.mrf.mxu0
  %v689 = vadd.f32 0.0, %v688
  %690 = vmatmul.f32.gmra.mxu0 %v630
  %v691 = vpop.f32.mrf.mxu0
  %v692 = vadd.f32 0.0, %v691
  %693 = vdwg.mxu0
  %v694 = vld [vmem:[%s4] sm:$0xff]
  %v695 = vld [vmem:[%s4 + $0x8] sm:$0xff]
  %v696 = vld [vmem:[%s4 + $0x10] sm:$0xff]
  %v697 = vld [vmem:[%s4 + $0x18] sm:$0xff]
  %v698 = vld [vmem:[%s4 + $0x20] sm:$0xff]
  %v699 = vld [vmem:[%s4 + $0x28] sm:$0xff]
  %v700 = vld [vmem:[%s4 + $0x30] sm:$0xff]
  %v701 = vld [vmem:[%s4 + $0x38] sm:$0xff]
  %v702 = vld [vmem:[%s4 + $0x40] sm:$0xff]
  %v703 = vld [vmem:[%s4 + $0x48] sm:$0xff]
  %v704 = vld [vmem:[%s4 + $0x50] sm:$0xff]
  %v705 = vld [vmem:[%s4 + $0x58] sm:$0xff]
  %v706 = vld [vmem:[%s4 + $0x60] sm:$0xff]
  %v707 = vld [vmem:[%s4 + $0x68] sm:$0xff]
  %v708 = vld [vmem:[%s4 + $0x70] sm:$0xff]
  %v709 = vadd.f32 %v694, %v650
  %v710 = vadd.f32 %v695, %v653
  %v711 = vadd.f32 %v696, %v656
  %v712 = vadd.f32 %v697, %v659
  %v713 = vadd.f32 %v698, %v662
  %v714 = vadd.f32 %v699, %v665
  %v715 = vadd.f32 %v700, %v668
  %v716 = vadd.f32 %v701, %v671
  %v717 = vadd.f32 %v702, %v674
  %v718 = vadd.f32 %v703, %v677
  %v719 = vadd.f32 %v704, %v680
  %v720 = vadd.f32 %v705, %v683
  %v721 = vadd.f32 %v706, %v686
  %v722 = vadd.f32 %v707, %v689
  %v723 = vadd.f32 %v708, %v692
  %724 = vst.msk [vmem:[%s4] sm:$0xff] %vm208, %v709
  %725 = vst.msk [vmem:[%s4 + $0x8] sm:$0xff] %vm208, %v710
  %726 = vst.msk [vmem:[%s4 + $0x10] sm:$0xff] %vm208, %v711
  %727 = vst.msk [vmem:[%s4 + $0x18] sm:$0xff] %vm208, %v712
  %728 = vst.msk [vmem:[%s4 + $0x20] sm:$0xff] %vm208, %v713
  %729 = vst.msk [vmem:[%s4 + $0x28] sm:$0xff] %vm208, %v714
  %730 = vst.msk [vmem:[%s4 + $0x30] sm:$0xff] %vm208, %v715
  %731 = vst.msk [vmem:[%s4 + $0x38] sm:$0xff] %vm208, %v716
  %732 = vst.msk [vmem:[%s4 + $0x40] sm:$0xff] %vm208, %v717
  %733 = vst.msk [vmem:[%s4 + $0x48] sm:$0xff] %vm208, %v718
  %734 = vst.msk [vmem:[%s4 + $0x50] sm:$0xff] %vm208, %v719
  %735 = vst.msk [vmem:[%s4 + $0x58] sm:$0xff] %vm208, %v720
  %736 = vst.msk [vmem:[%s4 + $0x60] sm:$0xff] %vm208, %v721
  %737 = vst.msk [vmem:[%s4 + $0x68] sm:$0xff] %vm208, %v722
  %738 = vst.msk [vmem:[%s4 + $0x70] sm:$0xff] %vm208, %v723
  %v739 = vld [vmem:[%s4] sm:$0xff]
  %v740 = vld [vmem:[%s4 + $0x8] sm:$0xff]
  %v741 = vld [vmem:[%s4 + $0x10] sm:$0xff]
  %v742 = vld [vmem:[%s4 + $0x18] sm:$0xff]
  %v743 = vld [vmem:[%s4 + $0x20] sm:$0xff]
  %v744 = vld [vmem:[%s4 + $0x28] sm:$0xff]
  %v745 = vld [vmem:[%s4 + $0x30] sm:$0xff]
  %v746 = vld [vmem:[%s4 + $0x38] sm:$0xff]
  %v747 = vld [vmem:[%s4 + $0x40] sm:$0xff]
  %v748 = vld [vmem:[%s4 + $0x48] sm:$0xff]
  %v749 = vld [vmem:[%s4 + $0x50] sm:$0xff]
  %v750 = vld [vmem:[%s4 + $0x58] sm:$0xff]
  %v751 = vld [vmem:[%s4 + $0x60] sm:$0xff]
  %v752 = vld [vmem:[%s4 + $0x68] sm:$0xff]
  %v753 = vld [vmem:[%s4 + $0x70] sm:$0xff]
  %v754 = vld [vmem:[%s3] sm:$0x1]
  %v755 = vld [vmem:[%s3 + $0x1] sm:$0x1]
  %v756 = vld [vmem:[%s3 + $0x2] sm:$0x1]
  %v757 = vld [vmem:[%s3 + $0x3] sm:$0x1]
  %v758 = vld [vmem:[%s3 + $0x4] sm:$0x1]
  %v759 = vld [vmem:[%s3 + $0x5] sm:$0x1]
  %v760 = vld [vmem:[%s3 + $0x6] sm:$0x1]
  %v761 = vld [vmem:[%s3 + $0x7] sm:$0x1]
  %v762 = vld [vmem:[%s3 + $0x8] sm:$0x1]
  %v763 = vld [vmem:[%s3 + $0x9] sm:$0x1]
  %v764 = vld [vmem:[%s3 + $0xa] sm:$0x1]
  %v765 = vld [vmem:[%s3 + $0xb] sm:$0x1]
  %v766 = vld [vmem:[%s3 + $0xc] sm:$0x1]
  %v767 = vld [vmem:[%s3 + $0xd] sm:$0x1]
  %v768 = vld [vmem:[%s3 + $0xe] sm:$0x1]
  %v784 = vperm.slane %v754, 0
  %v785 = vperm.slane %v755, 0
  %v786 = vperm.slane %v756, 0
  %v787 = vperm.slane %v757, 0
  %v788 = vperm.slane %v758, 0
  %v789 = vperm.slane %v759, 0
  %v790 = vperm.slane %v760, 0
  %v791 = vperm.slane %v761, 0
  %v792 = vperm.slane %v762, 0
  %v793 = vperm.slane %v763, 0
  %v794 = vperm.slane %v764, 0
  %v795 = vperm.slane %v765, 0
  %v796 = vperm.slane %v766, 0
  %v797 = vperm.slane %v767, 0
  %v798 = vperm.slane %v768, 0
  %v814 = vmul.f32 %v739, %v784
  %v815 = vmul.f32 %v740, %v785
  %v816 = vmul.f32 %v741, %v786
  %v817 = vmul.f32 %v742, %v787
  %v818 = vmul.f32 %v743, %v788
  %v819 = vmul.f32 %v744, %v789
  %v820 = vmul.f32 %v745, %v790
  %v821 = vmul.f32 %v746, %v791
  %v822 = vmul.f32 %v747, %v792
  %v823 = vmul.f32 %v748, %v793
  %v824 = vmul.f32 %v749, %v794
  %v825 = vmul.f32 %v750, %v795
  %v826 = vmul.f32 %v751, %v796
  %v827 = vmul.f32 %v752, %v797
  %v828 = vmul.f32 %v753, %v798
  %829 = vst.msk [vmem:[%s4] sm:$0xff] %vm208, %v814
  %830 = vst.msk [vmem:[%s4 + $0x8] sm:$0xff] %vm208, %v815
  %831 = vst.msk [vmem:[%s4 + $0x10] sm:$0xff] %vm208, %v816
  %832 = vst.msk [vmem:[%s4 + $0x18] sm:$0xff] %vm208, %v817
  %833 = vst.msk [vmem:[%s4 + $0x20] sm:$0xff] %vm208, %v818
  %834 = vst.msk [vmem:[%s4 + $0x28] sm:$0xff] %vm208, %v819
  %835 = vst.msk [vmem:[%s4 + $0x30] sm:$0xff] %vm208, %v820
  %836 = vst.msk [vmem:[%s4 + $0x38] sm:$0xff] %vm208, %v821
  %837 = vst.msk [vmem:[%s4 + $0x40] sm:$0xff] %vm208, %v822
  %838 = vst.msk [vmem:[%s4 + $0x48] sm:$0xff] %vm208, %v823
  %839 = vst.msk [vmem:[%s4 + $0x50] sm:$0xff] %vm208, %v824
  %840 = vst.msk [vmem:[%s4 + $0x58] sm:$0xff] %vm208, %v825
  %841 = vst.msk [vmem:[%s4 + $0x60] sm:$0xff] %vm208, %v826
  %842 = vst.msk [vmem:[%s4 + $0x68] sm:$0xff] %vm208, %v827
  %843 = vst.msk [vmem:[%s4 + $0x70] sm:$0xff] %vm208, %v828
  // Predicated region
  $region18: #{tpu_custom_call.1} parent=0 // pred_check
    _
  $region19: #{tpu_custom_call.1} parent=0 // pred_check_branch
    %845 = sbr.rel (0) target = $region21
  $region20: #{tpu_custom_call.1} parent=0 // pred_region
    _
  $region21: #{tpu_custom_call.1} parent=0 // pred_fallthru
    _
  // Predicated region
  $region22: #{tpu_custom_call.1} parent=0 // pred_check
    _
  $region23: #{tpu_custom_call.1} parent=0 // pred_check_branch
    %847 = sbr.rel (0) target = $region25
  $region24: #{tpu_custom_call.1} parent=0 // pred_region
    _
  $region25: #{tpu_custom_call.1} parent=0 // pred_fallthru
    _

</llo_original>
